<compile_context>
chip_gen: v7x
topology: tpu7x:2x2x1
jax: 0.10.0
libtpu: 0.0.40
codegen_flags: <defaults>
</compile_context>

<pallas_src>
import jax
import jax.numpy as jnp
from jax import lax
from jax.experimental import pallas as pl
from jax.experimental.pallas import tpu as pltpu


_RESIDENT_MAX_VOCAB = 2048   # largest vocab kept as a single VMEM-resident tile
_VOCAB_TILE = 512            # streamed vocab tile (multiple of 256: fills MXU K)


def _round_up(x, m):
    return (x + m - 1) // m * m


def _vmem_cap_bytes():
    """Physical VMEM per TensorCore (fallback: smallest chip, v7x's 64 MiB)."""
    try:
        return int(pltpu.get_tpu_info().vmem_capacity_bytes)
    except Exception:
        return 64 << 20


# ---------------------------------------------------------------------------
# Path A: one-hot x table on the MXU, vocab-tiled, table (tile) VMEM-resident.
# ---------------------------------------------------------------------------
def _onehot_matmul_kernel(ids_ref, table_ref, out_ref, acc_ref):
    # ids_ref:   (T, 1)  int32 token ids for this token block
    # table_ref: (tv, D) one vocab tile of the embedding table
    # out_ref:   (T, D)  gathered embeddings
    # acc_ref:   (T, D)  f32 accumulator across vocab tiles
    k = pl.program_id(1)

    @pl.when(k == 0)
    def _():
        acc_ref[...] = jnp.zeros_like(acc_ref)

    ids = ids_ref[...]                                       # (T, 1)
    T, tv = ids.shape[0], table_ref.shape[0]
    vocab_ids = k * tv + lax.broadcasted_iota(jnp.int32, (T, tv), 1)
    onehot = (ids == vocab_ids).astype(table_ref.dtype)      # exact 0/1
    acc_ref[...] += jnp.dot(onehot, table_ref[...],
                            preferred_element_type=jnp.float32)

    @pl.when(k == pl.num_programs(1) - 1)
    def _():
        out_ref[...] = acc_ref[...].astype(out_ref.dtype)


def _embed_onehot(ids, weight, n_tok, block_tokens, resident_budget):
    V, D = weight.shape
    itemsize = weight.dtype.itemsize

    T = 256 if block_tokens is None else block_tokens
    T = max(8, min(_round_up(T, 8), _round_up(n_tok, 8)))
    n_pad = _round_up(n_tok, T)
    if n_pad != n_tok:
        ids = jnp.concatenate([ids, jnp.zeros((n_pad - n_tok,), jnp.int32)])
    n_blocks = n_pad // T
    ids2d = ids.reshape(n_pad, 1)

    table_bytes = V * D * itemsize
    if table_bytes <= resident_budget and V <= _RESIDENT_MAX_VOCAB:
        # Single vocab tile; constant block index -> DMA'd once, stays resident.
        tv, table = V, weight
    else:
        # Vocab-tiled: bounds the streamed table slab and the (T, tv) one-hot
        # to a few hundred KiB so the path also fits v7x's smaller VMEM.
        tv = _VOCAB_TILE
        v_pad = _round_up(V, tv)
        table = (weight if v_pad == V else
                 jnp.concatenate([weight,
                                  jnp.zeros((v_pad - V, D), weight.dtype)]))
    Vp = table.shape[0]
    n_vt = Vp // tv

    need = (2 * tv * D * itemsize        # table tile (double-buffered)
            + 2 * T * D * itemsize       # output tile (double-buffered)
            + 2 * T * 4                  # ids tile
            + T * D * 4                  # f32 accumulator scratch
            + T * tv * 4)                # materialized one-hot
    vmem_limit = int(min(max(2 * need + (2 << 20), 8 << 20), 32 << 20))

    stream_bytes = table_bytes if n_vt == 1 else n_blocks * Vp * D * itemsize
    cost = pl.CostEstimate(
        flops=int(2 * n_pad * Vp * D), transcendentals=0,
        bytes_accessed=int(n_pad * 4 + stream_bytes + n_pad * D * itemsize))

    out_flat = pl.pallas_call(
        _onehot_matmul_kernel,
        out_shape=jax.ShapeDtypeStruct((n_pad, D), weight.dtype),
        grid_spec=pltpu.PrefetchScalarGridSpec(
            num_scalar_prefetch=0,
            grid=(n_blocks, n_vt),                 # vocab (reduction) axis last
            in_specs=[
                pl.BlockSpec((T, 1), lambda i, k: (i, 0)),
                pl.BlockSpec((tv, D), lambda i, k: (k, 0)),
            ],
            out_specs=pl.BlockSpec((T, D), lambda i, k: (i, 0)),
            scratch_shapes=[pltpu.VMEM((T, D), jnp.float32)],
        ),
        compiler_params=pltpu.CompilerParams(
            dimension_semantics=("parallel", "arbitrary"),
            vmem_limit_bytes=vmem_limit),
        cost_estimate=cost,
    )(ids2d, table)

    return out_flat[:n_tok]


# ---------------------------------------------------------------------------
# Path B: large-row tables — HBM-resident table, SMEM ids, DMA row gather.
# ---------------------------------------------------------------------------
def _dma_gather_kernel(ids_ref, w_hbm_ref, out_ref, sem):
    # ids_ref:   (n_chunk,) int32 ids in SMEM (scalar prefetch)
    # w_hbm_ref: (V, D) embedding table left in HBM (memory_space=pl.ANY)
    # out_ref:   (T, D) VMEM output block for this grid step
    # sem:       (1,)  DMA semaphore shared by all row copies of this block
    i = pl.program_id(0)
    T, _ = out_ref.shape
    V = w_hbm_ref.shape[0]
    base = i * T

    # Issue one row DMA per token.  Unrolled so SMEM id loads / address math /
    # descriptor pushes pipeline instead of paying loop overhead per row.
    def issue(t, carry):
        row = ids_ref[base + t]
        pltpu.make_async_copy(w_hbm_ref.at[row], out_ref.at[t],
                              sem.at[0]).start()
        return carry

    lax.fori_loop(0, T, issue, 0, unroll=8)

    # Single combined wait: each row copy signals sem[0] with D*itemsize bytes,
    # so one descriptor spanning the whole (T, D) block consumes exactly the
    # accumulated count (replaces T per-row waits on the critical-path tail).
    if T <= V:
        wait_src = w_hbm_ref.at[pl.ds(0, T)]
    else:  # tiny-vocab fallback: any same-sized descriptor works for the wait
        wait_src = out_ref
    pltpu.make_async_copy(wait_src, out_ref, sem.at[0]).wait()


def _gather_chunk(ids_chunk, weight, T):
    (n,) = ids_chunk.shape                     # multiple of T
    V, D = weight.shape
    itemsize = weight.dtype.itemsize
    n_blocks = n // T

    # Right-sized VMEM request: double-buffered (T, D) output block + slack.
    vmem_limit = int(min(max(4 * T * D * itemsize + (2 << 20), 8 << 20),
                         32 << 20))
    cost = pl.CostEstimate(flops=0, transcendentals=0,
                           bytes_accessed=int(n * 4 + 2 * n * D * itemsize))

    return pl.pallas_call(
        _dma_gather_kernel,
        out_shape=jax.ShapeDtypeStruct((n, D), weight.dtype),
        grid_spec=pltpu.PrefetchScalarGridSpec(
            num_scalar_prefetch=1,                       # token ids -> SMEM
            grid=(n_blocks,),
            in_specs=[pl.BlockSpec(memory_space=pl.ANY)],  # table stays in HBM
            out_specs=pl.BlockSpec((T, D), lambda i, ids_s: (i, 0)),
            scratch_shapes=[pltpu.SemaphoreType.DMA((1,))],
        ),
        compiler_params=pltpu.CompilerParams(
            dimension_semantics=("parallel",),
            vmem_limit_bytes=vmem_limit),
        cost_estimate=cost,
    )(ids_chunk, weight)


def _embed_gather(ids, weight, n_tok, block_tokens, max_prefetch_tokens):
    V, D = weight.shape
    itemsize = weight.dtype.itemsize
    row_bytes = D * itemsize

    # Token tile: large enough to amortize the ~0.35us/step pipeline overhead
    # (matters most on v7x's fast HBM), bounded so the double-buffered output
    # block stays <= ~8 MiB of VMEM.
    t_target = 1024 if block_tokens is None else block_tokens
    t_cap = max(8, ((8 << 20) // max(1, 2 * row_bytes)) // 8 * 8)
    T = max(8, min(_round_up(t_target, 8), _round_up(n_tok, 8), t_cap))

    n_pad = _round_up(n_tok, T)
    if n_pad != n_tok:
        ids = jnp.concatenate([ids, jnp.zeros((n_pad - n_tok,), jnp.int32)])

    # Bound how many ids a single pallas_call scalar-prefetches into SMEM
    # (SMEM is KiB-scale; a whole-array prefetch would overflow at large B*S).
    chunk = max(T, (max_prefetch_tokens // T) * T)
    outs = []
    for start in range(0, n_pad, chunk):
        stop = min(start + chunk, n_pad)
        outs.append(_gather_chunk(ids[start:stop], weight, T))
    out_flat = outs[0] if len(outs) == 1 else jnp.concatenate(outs, axis=0)
    return out_flat[:n_tok]


# ---------------------------------------------------------------------------
# Wrapper (== TokenEmbedder.forward)
# ---------------------------------------------------------------------------
def token_embedder_forward(src_word, weight, *, block_tokens=None,
                           force_gather=False, max_prefetch_tokens=32768):
    """Pallas equivalent of TokenEmbedder.forward(src_word).

    padding_mask / decoder are unused by the reference forward.  Out-of-range
    ids are clamped to [0, V-1] (torch nn.Embedding would raise) — explicit
    contract of this implementation.
    """
    B, S = src_word.shape
    V, D = weight.shape
    itemsize = weight.dtype.itemsize
    n_tok = B * S

    ids = jnp.clip(src_word.reshape(-1).astype(jnp.int32), 0, V - 1)

    row_bytes = D * itemsize
    table_bytes = V * row_bytes
    resident_budget = min(_vmem_cap_bytes() // 8, 4 << 20)

    # Regime selection: per-row DMAs only win when each row is large enough not
    # to be descriptor/latency bound AND the table is too big to sit (tiled) in
    # VMEM; small-row tables take the MXU one-hot path even for large vocabs.
    use_gather = force_gather or (row_bytes >= 512
                                  and table_bytes > resident_budget)

    if use_gather:
        out_flat = _embed_gather(ids, weight, n_tok, block_tokens,
                                 max_prefetch_tokens)
    else:
        out_flat = _embed_onehot(ids, weight, n_tok, block_tokens,
                                 resident_budget)
    return out_flat.reshape(B, S, D)


def build_embedding_weight(key, num_embeddings, embedding_dim, padding_idx):
    """Matches fairseq's Embedding(): nn.init.normal_(w, 0, dim**-0.5).

    The reference calls normal_ AFTER nn.Embedding's constructor, so the
    padding_idx row is NOT re-zeroed — reproduced exactly here.
    """
    del padding_idx  # not zeroed (normal_ overwrites the zeroed row)
    std = embedding_dim ** (-0.5)
    return std * jax.random.normal(
        key, (num_embeddings, embedding_dim), dtype=jnp.float32)


if __name__ == "__main__":
    key = jax.random.PRNGKey(0)
    k_w, k_ids = jax.random.split(key)

    # --- Case 1: module-sized demo (vocab 64, dim 32, batch 2, seq 8) -------
    V, D, B, S, padding_idx = 64, 32, 2, 8, 1
    weight = build_embedding_weight(k_w, V, D, padding_idx)
    src_word = jax.random.randint(k_ids, (B, S), 0, V, dtype=jnp.int32)
    src_word = src_word.at[0, -1].set(padding_idx)   # a real batch has padding

    ref = jnp.take(weight, src_word.reshape(-1), axis=0).reshape(B, S, D)
    out_mm = token_embedder_forward(src_word, weight)                      # A
    out_dma = token_embedder_forward(src_word, weight, force_gather=True)  # B
    out_mm, out_dma = jax.block_until_ready((out_mm, out_dma))
    assert out_mm.shape == (B, S, D) and out_mm.dtype == weight.dtype
    assert out_dma.shape == (B, S, D) and out_dma.dtype == weight.dtype
    assert jnp.allclose(out_mm, ref, atol=1e-6), "one-hot path mismatch"
    assert jnp.allclose(out_dma, ref, atol=1e-6), "gather path mismatch"

    # --- Case 2: multi-block tiling, ragged tail, chunked id prefetch -------
    B2, S2 = 2, 136
    src2 = jax.random.randint(jax.random.fold_in(k_ids, 1), (B2, S2), 0, V,
                              dtype=jnp.int32)
    ref2 = jnp.take(weight, src2.reshape(-1), axis=0).reshape(B2, S2, D)
    for fg in (False, True):
        out2 = token_embedder_forward(src2, weight, block_tokens=64,
                                      force_gather=fg)
        assert jnp.allclose(jax.block_until_ready(out2), ref2, atol=1e-6), \
            "multi-block mismatch"
    out2c = token_embedder_forward(src2, weight, block_tokens=64,
                                   force_gather=True, max_prefetch_tokens=128)
    assert jnp.allclose(jax.block_until_ready(out2c), ref2, atol=1e-6), \
        "chunked-gather mismatch"

    # --- Case 3: vocab-tiled one-hot path (V above resident tile limit) -----
    V3, D3, B3, S3 = 2560, 32, 2, 24
    w3 = build_embedding_weight(jax.random.fold_in(k_w, 3), V3, D3, padding_idx)
    src3 = jax.random.randint(jax.random.fold_in(k_ids, 3), (B3, S3), 0, V3,
                              dtype=jnp.int32)
    ref3 = jnp.take(w3, src3.reshape(-1), axis=0).reshape(B3, S3, D3)
    out3 = token_embedder_forward(src3, w3)                 # streamed one-hot
    out3g = token_embedder_forward(src3, w3, force_gather=True)
    out3, out3g = jax.block_until_ready((out3, out3g))
    assert jnp.allclose(out3, ref3, atol=1e-6), "vocab-tiled one-hot mismatch"
    assert jnp.allclose(out3g, ref3, atol=1e-6), "large-vocab gather mismatch"

    print("KERNEL_OK")
</pallas_src>

<mosaic_0001>
module attributes {stable_mosaic.version = 11 : i64} {
  func.func @_onehot_matmul_kernel(%arg0: i32, %arg1: i32, %arg2: memref<16x1xi32, #tpu.memory_space<vmem>>, %arg3: memref<64x32xf32, #tpu.memory_space<vmem>>, %arg4: memref<16x32xf32, #tpu.memory_space<vmem>>, %arg5: memref<16x32xf32, #tpu.memory_space<vmem>>) attributes {dimension_semantics = [#tpu.dimension_semantics<parallel>, #tpu.dimension_semantics<arbitrary>], iteration_bounds = array<i64: 1, 1>, scalar_prefetch = 0 : i64, scratch_operands = 1 : i64, tpu.core_type = #tpu.core_type<tc>, window_params = [{transform_indices = @transform_0, window_bounds = array<i64: 16, 1>}, {transform_indices = @transform_1, window_bounds = array<i64: 64, 32>}, {transform_indices = @transform_2, window_bounds = array<i64: 16, 32>}]} {
    %c0_i32 = arith.constant 0 : i32
    %0 = arith.cmpi eq, %arg1, %c0_i32 : i32
    %1 = arith.extui %0 : i1 to i32
    %c0_i32_0 = arith.constant 0 : i32
    %2 = arith.cmpi ne, %1, %c0_i32_0 : i32
    scf.if %2 {
      %cst_10 = arith.constant 0.000000e+00 : f32
      %20 = vector.broadcast %cst_10 : f32 to vector<16x32xf32>
      %c0_11 = arith.constant 0 : index
      %c0_12 = arith.constant 0 : index
      %21 = vector.load %arg5[%c0_11, %c0_12] : memref<16x32xf32, #tpu.memory_space<vmem>>, vector<16x32xf32>
      tpu.vector_store %arg5[%c0_11, %c0_12], %20 {strides = array<i32>} : memref<16x32xf32, #tpu.memory_space<vmem>>, vector<16x32xf32>,
    } else {
    }
    %c0 = arith.constant 0 : index
    %c0_1 = arith.constant 0 : index
    %3 = vector.load %arg2[%c0, %c0_1] : memref<16x1xi32, #tpu.memory_space<vmem>>, vector<16x1xi32>
    %c64_i32 = arith.constant 64 : i32
    %4 = arith.muli %arg1, %c64_i32 : i32
    %5 = tpu.iota {dimensions = array<i32: 1>} : vector<16x64xi32>
    %6 = vector.broadcast %4 : i32 to vector<16x64xi32>
    %7 = arith.addi %6, %5 : vector<16x64xi32>
    %8 = vector.broadcast %3 : vector<16x1xi32> to vector<16x64xi32>
    %9 = arith.cmpi eq, %8, %7 : vector<16x64xi32>
    %10 = arith.extui %9 : vector<16x64xi1> to vector<16x64xi32>
    %11 = arith.sitofp %10 : vector<16x64xi32> to vector<16x64xf32>
    %c0_2 = arith.constant 0 : index
    %c0_3 = arith.constant 0 : index
    %12 = vector.load %arg5[%c0_2, %c0_3] : memref<16x32xf32, #tpu.memory_space<vmem>>, vector<16x32xf32>
    %c0_4 = arith.constant 0 : index
    %c0_5 = arith.constant 0 : index
    %13 = vector.load %arg3[%c0_4, %c0_5] : memref<64x32xf32, #tpu.memory_space<vmem>>, vector<64x32xf32>
    %cst = arith.constant dense<0.000000e+00> : vector<16x32xf32>
    %14 = tpu.matmul %11, %13, %cst {dimension_numbers = #tpu.dot_dimension_numbers<[1], [0], [0], [1], [0, 0, 1, 1], [], []>} : vector<16x64xf32>, vector<64x32xf32>, vector<16x32xf32> -> vector<16x32xf32>
    %15 = arith.addf %12, %14 : vector<16x32xf32>
    %c0_6 = arith.constant 0 : index
    %c0_7 = arith.constant 0 : index
    %16 = vector.load %arg5[%c0_6, %c0_7] : memref<16x32xf32, #tpu.memory_space<vmem>>, vector<16x32xf32>
    tpu.vector_store %arg5[%c0_6, %c0_7], %15 {strides = array<i32>} : memref<16x32xf32, #tpu.memory_space<vmem>>, vector<16x32xf32>,
    %c0_i32_8 = arith.constant 0 : i32
    %17 = arith.cmpi eq, %arg1, %c0_i32_8 : i32
    %18 = arith.extui %17 : i1 to i32
    %c0_i32_9 = arith.constant 0 : i32
    %19 = arith.cmpi ne, %18, %c0_i32_9 : i32
    scf.if %19 {
      %c0_10 = arith.constant 0 : index
      %c0_11 = arith.constant 0 : index
      %20 = vector.load %arg5[%c0_10, %c0_11] : memref<16x32xf32, #tpu.memory_space<vmem>>, vector<16x32xf32>
      %c0_12 = arith.constant 0 : index
      %c0_13 = arith.constant 0 : index
      %21 = vector.load %arg4[%c0_12, %c0_13] : memref<16x32xf32, #tpu.memory_space<vmem>>, vector<16x32xf32>
      tpu.vector_store %arg4[%c0_12, %c0_13], %20 {strides = array<i32>} : memref<16x32xf32, #tpu.memory_space<vmem>>, vector<16x32xf32>,
    } else {
    }
    return
  }
  func.func @transform_0(%arg0: i32, %arg1: i32) -> (i32, i32) {
    %c0_i32 = arith.constant 0 : i32
    %c0_i32_0 = arith.constant 0 : i32
    return %arg0, %c0_i32 : i32, i32
  }
  func.func @transform_1(%arg0: i32, %arg1: i32) -> (i32, i32) {
    %c0_i32 = arith.constant 0 : i32
    %c0_i32_0 = arith.constant 0 : i32
    return %arg1, %c0_i32 : i32, i32
  }
  func.func @transform_2(%arg0: i32, %arg1: i32) -> (i32, i32) {
    %c0_i32 = arith.constant 0 : i32
    %c0_i32_0 = arith.constant 0 : i32
    return %arg0, %c0_i32 : i32, i32
  }
}

</mosaic_0001>

<llo_original>
// kernel: tpu_custom_call.1
$region0: #{tpu_custom_call.1}
  #allocation0 [shape = 'u32[]', space=smem, size = 0x4, offset = 0x4, fixed_abs, tag = 'smem constant byte address 0x4 - core index']
  #allocation1 [shape = 'u32[144,128]{1,0:T(1,128)}', space=vmem, size = 0x12000, scoped, tag = 'internal scratch']
  #allocation2 [shape = 'f32[16,32]{1,0:T(8,128)}', space=vmem, size = 0x2000, scoped, tag = 'scratch operand']
  %s0 = inlined_call_operand.vmem [shape: s32[16,1], index: 0, kind: input, shape index: {}]
  %s1 = inlined_call_operand.vmem [shape: f32[64,32], index: 1, kind: input, shape index: {}]
  %s2 = inlined_call_operand.hbm [shape: f32[16,32], index: 2, kind: output, shape index: {}]
  %s3 = sld [smem:[#allocation0]]
  $region26: #{tpu_custom_call.1} parent=0
    _
  %s5 = ssub.s32 1, %s3
  %s6 = scalar_select 0, %s5, %s3
  $region1: #{tpu_custom_call.1} parent=0
    #allocation3 [shape = 'u8[8192]{0}', space=vmem, size = 0x2000, scoped, tag = 'output window, operand 0, single buffered']
    #allocation4 [shape = 's32[1]{0}', space=sflag, size = 0x4, scoped, tag = 'scoped memory for tpu_custom_call.1']
    %7 = vsyncpa [#allocation4], 0
    // Predicated region
    $region2: #{tpu_custom_call.1} parent=1 // pred_check
      _
    $region3: #{tpu_custom_call.1} parent=1 // pred_check_branch
      %9 = sbr.rel (0) target = $region5
    $region4: #{tpu_custom_call.1} parent=1 // pred_region
      _
    $region5: #{tpu_custom_call.1} parent=1 // pred_fallthru
      _
    // Predicated region
    $region6: #{tpu_custom_call.1} parent=1 // pred_check
      _
    $region7: #{tpu_custom_call.1} parent=1 // pred_check_branch
      %11 = sbr.rel (0) target = $region9
    $region8: #{tpu_custom_call.1} parent=1 // pred_region
      _
    $region9: #{tpu_custom_call.1} parent=1 // pred_fallthru
      _
    %p12 = scmp.eq.s32.totalorder 0, 0
    // Predicated region
    $region10: #{tpu_custom_call.1} parent=1 // pred_check
      %p13 = pneg %p12
    $region11: #{tpu_custom_call.1} parent=1 // pred_check_branch
      %15 = sbr.rel (%p13) target = $region13
    $region12: #{tpu_custom_call.1} parent=1 // pred_region
      %vm16 = vcmask 261120
      %17 = vst.msk [vmem:[#allocation2] sm:$0xff] %vm16, 0.0
      %18 = vst.msk [vmem:[#allocation2 + $0x8] sm:$0xff] %vm16, 0.0
    $region13: #{tpu_custom_call.1} parent=1 // pred_fallthru
      _
    %v19 = vld [vmem:[%s0] sm:$0xff]
    %v20 = vld [vmem:[%s0 + $0x8] sm:$0xff]
    %s21 = smul.u32 0, 64
    %v22 = vlaneseq
    %v23 = vand.u32 %v22, 127
    %v24 = vstv %s21
    %v25 = vadd.s32 %v24, %v23
    %26 = vset.pattern.permute.xlu0 0
    %27 = vperm.xlu0 %26, %v19
    %v28 = vpop.permute.xlu0 %27
    %29 = vset.pattern.permute.xlu0 0
    %30 = vperm.xlu0 %29, %v20
    %v31 = vpop.permute.xlu0 %30
    %vm32 = vcmp.eq.s32.totalorder %v28, %v25
    %vm33 = vcmp.eq.s32.totalorder %v31, %v25
    %v34 = vsel %vm32, 1, 0
    %v35 = vsel %vm33, 1, 0
    %v36 = vcvt.s32.f32 %v34
    %v37 = vcvt.s32.f32 %v35
    %v38 = vld [vmem:[#allocation2] sm:$0xff]
    %v39 = vld [vmem:[#allocation2 + $0x8] sm:$0xff]
    %v40 = vld [vmem:[%s1] sm:$0xff]
    %v41 = vld [vmem:[%s1 + $0x8] sm:$0xff]
    %v42 = vld [vmem:[%s1 + $0x10] sm:$0xff]
    %v43 = vld [vmem:[%s1 + $0x18] sm:$0xff]
    %v44 = vld [vmem:[%s1 + $0x20] sm:$0xff]
    %v45 = vld [vmem:[%s1 + $0x28] sm:$0xff]
    %v46 = vld [vmem:[%s1 + $0x30] sm:$0xff]
    %v47 = vld [vmem:[%s1 + $0x38] sm:$0xff]
    %vm48 = vcmask 523264
    %v50 = vsel %vm48, %v36, 0
    %v53 = vsel %vm48, %v37, 0
    %55 = vmatprep.subr.mxu0 0.0
    %56 = vmatpush1.msra.mxu0 %v40
    %57 = vmatprep.subr.mxu0 0.0
    %58 = vmatpush1.msra.mxu0 %v41
    %59 = vmatprep.subr.mxu0 0.0
    %60 = vmatpush1.msra.mxu0 %v42
    %61 = vmatprep.subr.mxu0 0.0
    %62 = vmatpush1.msra.mxu0 %v43
    %63 = vmatprep.subr.mxu0 0.0
    %64 = vmatpush1.msra.mxu0 %v44
    %65 = vmatprep.subr.mxu0 0.0
    %66 = vmatpush1.msra.mxu0 %v45
    %67 = vmatprep.subr.mxu0 0.0
    %68 = vmatpush1.msra.mxu0 %v46
    %69 = vmatprep.subr.mxu0 0.0
    %70 = vmatpush1.msra.mxu0 %v47
    %71 = vmatprep.subr.mxu0 0.0
    %72 = vmatpush1.msra.mxu0 0.0
    %73 = vmatprep.subr.mxu0 0.0
    %74 = vmatpush1.msra.mxu0 0.0
    %75 = vmatprep.subr.mxu0 0.0
    %76 = vmatpush1.msra.mxu0 0.0
    %77 = vmatprep.subr.mxu0 0.0
    %78 = vmatpush1.msra.mxu0 0.0
    %79 = vmatprep.subr.mxu0 0.0
    %80 = vmatpush1.msra.mxu0 0.0
    %81 = vmatprep.subr.mxu0 0.0
    %82 = vmatpush1.msra.mxu0 0.0
    %83 = vmatprep.subr.mxu0 0.0
    %84 = vmatpush1.msra.mxu0 0.0
    %85 = vmatprep.subr.mxu0 0.0
    %86 = vmatpush1.msra.mxu0 0.0
    %87 = vmatprep.subr.mxu0 0.0
    %88 = vmatpush1.msra.mxu0 0.0
    %89 = vmatprep.subr.mxu0 0.0
    %90 = vmatpush1.msra.mxu0 0.0
    %91 = vmatprep.subr.mxu0 0.0
    %92 = vmatpush1.msra.mxu0 0.0
    %93 = vmatprep.subr.mxu0 0.0
    %94 = vmatpush1.msra.mxu0 0.0
    %95 = vmatprep.subr.mxu0 0.0
    %96 = vmatpush1.msra.mxu0 0.0
    %97 = vmatprep.subr.mxu0 0.0
    %98 = vmatpush1.msra.mxu0 0.0
    %99 = vmatprep.subr.mxu0 0.0
    %100 = vmatpush1.msra.mxu0 0.0
    %101 = vmatprep.subr.mxu0 0.0
    %102 = vmatpush1.msra.mxu0 0.0
    %103 = vmatprep.subr.mxu0 0.0
    %104 = vmatpush1.msra.mxu0 0.0
    %105 = vmatprep.subr.mxu0 0.0
    %106 = vmatpush1.msra.mxu0 0.0
    %107 = vmatprep.subr.mxu0 0.0
    %108 = vmatpush1.msra.mxu0 0.0
    %109 = vmatprep.subr.mxu0 0.0
    %110 = vmatpush1.msra.mxu0 0.0
    %111 = vmatprep.subr.mxu0 0.0
    %112 = vmatpush1.msra.mxu0 0.0
    %113 = vmatprep.subr.mxu0 0.0
    %114 = vmatpush1.msra.mxu0 0.0
    %115 = vmatprep.subr.mxu0 0.0
    %116 = vmatpush1.msra.mxu0 0.0
    %117 = vmatprep.subr.mxu0 0.0
    %118 = vmatpush1.msra.mxu0 0.0
    %119 = vmatprep.mubr.f32.mxu0 0.0
    %120 = vmatmul.mubr.f32.gmra.mrb[0].mxu0 %v50
    %v121 = vpop.f32.mrb[0].mxu0
    %v122 = vadd.f32 0.0, %v121
    %v123 = vpop.f32.mrb[0].mxu0
    %124 = vmatprep.mubr.f32.mxu0 0.0
    %125 = vmatmul.mubr.f32.gmra.mrb[0].mxu0 %v53
    %v126 = vpop.f32.mrb[0].mxu0
    %v127 = vadd.f32 0.0, %v126
    %v128 = vpop.f32.mrb[0].mxu0
    %129 = vdwg.mxu0
    %v130 = vadd.f32 %v38, %v122
    %v131 = vadd.f32 %v39, %v127
    %vm132 = vcmask 261120
    %133 = vst.msk [vmem:[#allocation2] sm:$0xff] %vm132, %v130
    %134 = vst.msk [vmem:[#allocation2 + $0x8] sm:$0xff] %vm132, %v131
    // Predicated region
    $region14: #{tpu_custom_call.1} parent=1 // pred_check
      %p135 = pneg %p12
    $region15: #{tpu_custom_call.1} parent=1 // pred_check_branch
      %137 = sbr.rel (%p135) target = $region17
    $region16: #{tpu_custom_call.1} parent=1 // pred_region
      %v138 = vld [vmem:[#allocation2] sm:$0xff]
      %v139 = vld [vmem:[#allocation2 + $0x8] sm:$0xff]
      %140 = vst.msk [vmem:[#allocation3] sm:$0xff] %vm132, %v138
      %141 = vst.msk [vmem:[#allocation3 + $0x8] sm:$0xff] %vm132, %v139
    $region17: #{tpu_custom_call.1} parent=1 // pred_fallthru
      _
    // Predicated region
    $region18: #{tpu_custom_call.1} parent=1 // pred_check
      _
    $region19: #{tpu_custom_call.1} parent=1 // pred_check_branch
      %143 = sbr.rel (0) target = $region21
    $region20: #{tpu_custom_call.1} parent=1 // pred_region
      %s145 = ssub.s32 256, 256
      %146 = vsyncadd [#allocation4], %s145
      %s147 = sshll.u32 [#allocation3], 4
      %s148 = int_to_ptr.vmem [resolvable:$true] %s147
      %153 = dma.vmem_to_hbm [thread:$0]  %s148, 256, %s2, [#allocation4], 128, 128, 8
    $region21: #{tpu_custom_call.1} parent=1 // pred_fallthru
      _
    // Predicated region
    $region22: #{tpu_custom_call.1} parent=1 // pred_check
      _
    $region23: #{tpu_custom_call.1} parent=1 // pred_check_branch
      %155 = sbr.rel (0) target = $region25
    $region24: #{tpu_custom_call.1} parent=1 // pred_region
      %156 = dma.done [#allocation4], 256
    $region25: #{tpu_custom_call.1} parent=1 // pred_fallthru
      _
    %157 = vsyncpa [#allocation4], 1

</llo_original>
